<compile_context>
chip_gen: v5e
topology: v5e:2x2
jax: 0.10.0
libtpu: 0.0.40
codegen_flags: <defaults>
</compile_context>

<pallas_src>
import functools

import jax
import jax.numpy as jnp
from jax import lax
from jax.experimental import pallas as pl
from jax.experimental.pallas import tpu as pltpu


def _avgpool_construct_kernel(x_ref, gamma_ref, beta_ref, out_ref, cur_ref, *,
                              lengths, ary, eps, rc0, rc1):
    # x_ref:     (TB, L, D)         input rows for TB batch elements
    # gamma/beta:(1, D)             LayerNorm affine params
    # out_ref:   (TB, sum(L_i), D)  concatenated, LayerNorm'ed multi-scale output
    # cur_ref:   (TB, L//ary, D)    f32 scratch holding the current pooled level
    f32 = jnp.float32
    gamma = gamma_ref[...].astype(f32)            # (1, D)
    beta = beta_ref[...].astype(f32)              # (1, D)
    d = gamma_ref.shape[-1]
    inv_d = f32(1.0 / d)
    inv_ary = f32(1.0 / ary)
    depth = len(lengths)

    def layernorm(vals):
        # vals: (TB, rows, D) f32.  Feature dim is the real d_model (no pad),
        # so plain two-pass mean/var needs no mask.
        mu = jnp.sum(vals, axis=-1, keepdims=True) * inv_d
        diff = vals - mu
        var = jnp.sum(diff * diff, axis=-1, keepdims=True) * inv_d
        y = diff * lax.rsqrt(var + f32(eps)) * gamma + beta
        return y.astype(out_ref.dtype)

    # ---- Level 0: LayerNorm of the raw rows, chunked to bound f32 live ranges. ----
    L0 = lengths[0]
    for r in range(0, L0, rc0):
        n = min(rc0, L0 - r)
        out_ref[:, r:r + n, :] = layernorm(x_ref[:, r:r + n, :].astype(f32))

    if depth == 1:
        return

    # ---- Level 1: AvgPool1d(kernel=stride=ary) as a VPU segment sum,
    #      pooled straight from the input ref, chunked over pooled rows. ----
    lp1 = lengths[1]
    off = L0
    for r in range(0, lp1, rc1):
        n = min(rc1, lp1 - r)
        acc = x_ref[:, pl.ds(r * ary, n, stride=ary), :].astype(f32)
        for k in range(1, ary):
            acc = acc + x_ref[:, pl.ds(r * ary + k, n, stride=ary), :].astype(f32)
        pooled = acc * inv_ary                            # (TB, n, D) f32
        if depth > 2:
            cur_ref[:, r:r + n, :] = pooled               # next level pools from here
        out_ref[:, off + r:off + r + n, :] = layernorm(pooled)
    off += lp1

    # ---- Levels >= 2: small, pooled from the f32 scratch in one shot. ----
    for lvl in range(2, depth):
        lp = lengths[lvl]
        acc = cur_ref[:, pl.ds(0, lp, stride=ary), :]
        for k in range(1, ary):
            acc = acc + cur_ref[:, pl.ds(k, lp, stride=ary), :]
        pooled = acc * inv_ary
        if lvl + 1 < depth:
            # In-place overwrite of rows [0, lp): the strided reads above are
            # data dependencies of `pooled`, so they are traced (and ordered)
            # before this store.
            cur_ref[:, 0:lp, :] = pooled
        out_ref[:, off:off + lp, :] = layernorm(pooled)
        off += lp


def _tpu_generation_params():
    """Generation-aware VMEM limit / tile budget / TensorCore count."""
    kind = ""
    try:
        kind = jax.devices()[0].device_kind.lower()
    except Exception:  # pragma: no cover - defensive
        pass
    if "v7" in kind:
        # v7x: 64 MiB VMEM per TensorCore, 2 TCs per chip.  Leave headroom for
        # compiler-internal scratch instead of committing the full 64 MiB.
        return dict(vmem_limit=50 * 1024 * 1024,
                    budget=42 * 1024 * 1024,
                    multi_tc=True)
    multi_tc = ("v4" in kind) or ("v5p" in kind)  # megacore parts
    # v5e / v6e (and v4/v5p): 128 MiB VMEM -> use most of it.
    return dict(vmem_limit=104 * 1024 * 1024,
                budget=92 * 1024 * 1024,
                multi_tc=multi_tc)


def _pick_batch_tile(B, L, total, lengths, D, in_item, out_item, budget, multi_tc):
    """Largest batch tile whose (double-buffered) blocks fit the VMEM budget."""
    def pad8(n):
        return ((n + 7) // 8) * 8

    dp = ((D + 127) // 128) * 128                   # lane padding in VMEM
    scratch_rows = lengths[1] if len(lengths) > 1 else 8
    per_b = (2 * pad8(L) * dp * in_item             # input block, double-buffered
             + 2 * pad8(total) * dp * out_item      # output block, double-buffered
             + pad8(scratch_rows) * dp * 4)         # f32 scratch, single-buffered

    tb = max(1, min(B, budget // max(per_b, 1)))

    def ok(t):
        if B % t != 0:
            return False
        # Keep >=2 grid steps only where there are 2 TensorCores to shard over.
        if multi_tc and B >= 2 and (B // t) < 2:
            return False
        return True

    while tb > 1 and not ok(tb):
        tb -= 1
    return tb


def _row_chunk(n, max_rows=512):
    # Chunk starts land on multiples of max_rows (sublane aligned); the kernel
    # handles a ragged final chunk.
    return n if n <= max_rows else max_rows


def avg_pooling_construct(x, gamma, beta, *, depth, ary_size, eps=1e-5):
    B, L, D = x.shape
    lengths = [L]
    for _ in range(depth - 1):
        nxt = lengths[-1] // ary_size
        if nxt < 1:
            raise ValueError(
                f"Sequence length {L} too short for depth={depth}, "
                f"ary_size={ary_size} (a pooling level would be empty).")
        lengths.append(nxt)
    total = sum(lengths)

    params = _tpu_generation_params()
    tb = _pick_batch_tile(B, L, total, lengths, D,
                          x.dtype.itemsize, x.dtype.itemsize,
                          params["budget"], params["multi_tc"])
    grid = (B // tb,)
    scratch_rows = lengths[1] if depth > 1 else 8
    rc0 = _row_chunk(L)
    rc1 = _row_chunk(lengths[1]) if depth > 1 else 1

    kernel = functools.partial(
        _avgpool_construct_kernel,
        lengths=tuple(lengths), ary=ary_size, eps=float(eps), rc0=rc0, rc1=rc1)

    gamma2 = gamma.reshape(1, D)
    beta2 = beta.reshape(1, D)

    out = pl.pallas_call(
        kernel,
        out_shape=jax.ShapeDtypeStruct((B, total, D), x.dtype),
        grid_spec=pltpu.PrefetchScalarGridSpec(
            num_scalar_prefetch=0,
            grid=grid,
            in_specs=[
                # Last two block dims equal the full array dims -> legal even
                # when L/D are not multiples of (8, 128).
                pl.BlockSpec((tb, L, D), lambda g: (g, 0, 0)),
                pl.BlockSpec((1, D), lambda g: (0, 0)),   # gamma: VMEM-resident
                pl.BlockSpec((1, D), lambda g: (0, 0)),   # beta:  VMEM-resident
            ],
            out_specs=pl.BlockSpec((tb, total, D), lambda g: (g, 0, 0)),
            scratch_shapes=[pltpu.VMEM((tb, scratch_rows, D), jnp.float32)],
        ),
        compiler_params=pltpu.CompilerParams(
            dimension_semantics=("parallel",),
            vmem_limit_bytes=params["vmem_limit"],
        ),
    )(x, gamma2, beta2)
    return out


def _reference(x, gamma, beta, *, depth, ary_size, eps=1e-5):
    # Pure-JAX reference mirroring the PyTorch forward.
    B, L, D = x.shape
    outs = [x]
    cur = x
    for _ in range(depth - 1):
        Lc = cur.shape[1]
        Lp = Lc // ary_size
        cur = cur[:, :Lp * ary_size].reshape(B, Lp, ary_size, D).mean(axis=2)
        outs.append(cur)
    cat = jnp.concatenate(outs, axis=1)
    mu = cat.mean(-1, keepdims=True)
    var = ((cat - mu) ** 2).mean(-1, keepdims=True)
    return (cat - mu) / jnp.sqrt(var + eps) * gamma + beta


if __name__ == "__main__":
    # Small shapes consistent with the module: d_model=32, depth=3, ary_size=4.
    B, L, D = 2, 16, 32
    depth, ary_size = 3, 4

    key = jax.random.PRNGKey(0)
    kx, kg, kb = jax.random.split(key, 3)
    x = jax.random.normal(kx, (B, L, D), dtype=jnp.float32)
    # Non-trivial (but deterministic) affine params to exercise the full path.
    gamma = 1.0 + 0.1 * jax.random.normal(kg, (D,), dtype=jnp.float32)
    beta = 0.05 * jax.random.normal(kb, (D,), dtype=jnp.float32)

    out = avg_pooling_construct(x, gamma, beta, depth=depth, ary_size=ary_size)
    out = jax.block_until_ready(out)

    ref = _reference(x, gamma, beta, depth=depth, ary_size=ary_size)
    assert out.shape == ref.shape, (out.shape, ref.shape)
    assert jnp.allclose(out, ref, atol=1e-5, rtol=1e-5), float(
        jnp.max(jnp.abs(out - ref)))

    print("KERNEL_OK")
</pallas_src>

<mosaic_0001>
module attributes {stable_mosaic.version = 11 : i64} {
  func.func @_avgpool_construct_kernel(%arg0: i32, %arg1: memref<2x16x32xf32, #tpu.memory_space<vmem>>, %arg2: memref<1x32xf32, #tpu.memory_space<vmem>>, %arg3: memref<1x32xf32, #tpu.memory_space<vmem>>, %arg4: memref<2x21x32xf32, #tpu.memory_space<vmem>>, %arg5: memref<2x4x32xf32, #tpu.memory_space<vmem>>) attributes {dimension_semantics = [#tpu.dimension_semantics<parallel>], iteration_bounds = array<i64: 1>, scalar_prefetch = 0 : i64, scratch_operands = 1 : i64, tpu.core_type = #tpu.core_type<tc>, window_params = [{transform_indices = @transform_0, window_bounds = array<i64: 2, 16, 32>}, {pipeline_mode = #tpu.pipeline_mode<synchronous>, transform_indices = @transform_1, window_bounds = array<i64: 1, 32>}, {pipeline_mode = #tpu.pipeline_mode<synchronous>, transform_indices = @transform_2, window_bounds = array<i64: 1, 32>}, {transform_indices = @transform_3, window_bounds = array<i64: 2, 21, 32>}]} {
    %c0 = arith.constant 0 : index
    %c0_0 = arith.constant 0 : index
    %0 = vector.load %arg2[%c0, %c0_0] : memref<1x32xf32, #tpu.memory_space<vmem>>, vector<1x32xf32>
    %c0_1 = arith.constant 0 : index
    %c0_2 = arith.constant 0 : index
    %1 = vector.load %arg3[%c0_1, %c0_2] : memref<1x32xf32, #tpu.memory_space<vmem>>, vector<1x32xf32>
    %c0_3 = arith.constant 0 : index
    %c0_4 = arith.constant 0 : index
    %c0_5 = arith.constant 0 : index
    %2 = vector.load %arg1[%c0_3, %c0_4, %c0_5] : memref<2x16x32xf32, #tpu.memory_space<vmem>>, vector<2x16x32xf32>
    %cst = arith.constant dense<0.000000e+00> : vector<2x16xf32>
    %3 = vector.multi_reduction <add>, %2, %cst [2] : vector<2x16x32xf32> to vector<2x16xf32>
    %4 = vector.shape_cast %3 : vector<2x16xf32> to vector<2x16x1xf32>
    %cst_6 = arith.constant 3.125000e-02 : f32
    %5 = vector.broadcast %cst_6 : f32 to vector<2x16x1xf32>
    %6 = arith.mulf %4, %5 : vector<2x16x1xf32>
    %7 = vector.broadcast %6 : vector<2x16x1xf32> to vector<2x16x32xf32>
    %8 = arith.subf %2, %7 : vector<2x16x32xf32>
    %9 = arith.mulf %8, %8 : vector<2x16x32xf32>
    %cst_7 = arith.constant dense<0.000000e+00> : vector<2x16xf32>
    %10 = vector.multi_reduction <add>, %9, %cst_7 [2] : vector<2x16x32xf32> to vector<2x16xf32>
    %11 = vector.shape_cast %10 : vector<2x16xf32> to vector<2x16x1xf32>
    %cst_8 = arith.constant 3.125000e-02 : f32
    %12 = vector.broadcast %cst_8 : f32 to vector<2x16x1xf32>
    %13 = arith.mulf %11, %12 : vector<2x16x1xf32>
    %cst_9 = arith.constant 9.99999974E-6 : f32
    %14 = vector.broadcast %cst_9 : f32 to vector<2x16x1xf32>
    %15 = arith.addf %13, %14 : vector<2x16x1xf32>
    %16 = math.rsqrt %15 : vector<2x16x1xf32>
    %17 = vector.broadcast %16 : vector<2x16x1xf32> to vector<2x16x32xf32>
    %18 = arith.mulf %8, %17 : vector<2x16x32xf32>
    %19 = vector.shape_cast %0 : vector<1x32xf32> to vector<1x1x32xf32>
    %20 = vector.broadcast %19 : vector<1x1x32xf32> to vector<2x16x32xf32>
    %21 = arith.mulf %18, %20 : vector<2x16x32xf32>
    %22 = vector.shape_cast %1 : vector<1x32xf32> to vector<1x1x32xf32>
    %23 = vector.broadcast %22 : vector<1x1x32xf32> to vector<2x16x32xf32>
    %24 = arith.addf %21, %23 : vector<2x16x32xf32>
    %c0_10 = arith.constant 0 : index
    %c0_11 = arith.constant 0 : index
    %c0_12 = arith.constant 0 : index
    %25 = vector.load %arg4[%c0_10, %c0_11, %c0_12] : memref<2x21x32xf32, #tpu.memory_space<vmem>>, vector<2x16x32xf32>
    tpu.vector_store %arg4[%c0_10, %c0_11, %c0_12], %24 {strides = array<i32>} : memref<2x21x32xf32, #tpu.memory_space<vmem>>, vector<2x16x32xf32>,
    %c0_13 = arith.constant 0 : index
    %c0_14 = arith.constant 0 : index
    %c0_15 = arith.constant 0 : index
    %26 = tpu.strided_load %arg1[%c0_13, %c0_14, %c0_15] {strides = array<i32: 1, 4, 1>} : memref<2x16x32xf32, #tpu.memory_space<vmem>>, vector<2x4x32xf32>
    %c0_16 = arith.constant 0 : index
    %c1 = arith.constant 1 : index
    %c0_17 = arith.constant 0 : index
    %27 = tpu.strided_load %arg1[%c0_16, %c1, %c0_17] {strides = array<i32: 1, 4, 1>} : memref<2x16x32xf32, #tpu.memory_space<vmem>>, vector<2x4x32xf32>
    %28 = arith.addf %26, %27 : vector<2x4x32xf32>
    %c0_18 = arith.constant 0 : index
    %c2 = arith.constant 2 : index
    %c0_19 = arith.constant 0 : index
    %29 = tpu.strided_load %arg1[%c0_18, %c2, %c0_19] {strides = array<i32: 1, 4, 1>} : memref<2x16x32xf32, #tpu.memory_space<vmem>>, vector<2x4x32xf32>
    %30 = arith.addf %28, %29 : vector<2x4x32xf32>
    %c0_20 = arith.constant 0 : index
    %c3 = arith.constant 3 : index
    %c0_21 = arith.constant 0 : index
    %31 = tpu.strided_load %arg1[%c0_20, %c3, %c0_21] {strides = array<i32: 1, 4, 1>} : memref<2x16x32xf32, #tpu.memory_space<vmem>>, vector<2x4x32xf32>
    %32 = arith.addf %30, %31 : vector<2x4x32xf32>
    %cst_22 = arith.constant 2.500000e-01 : f32
    %33 = vector.broadcast %cst_22 : f32 to vector<2x4x32xf32>
    %34 = arith.mulf %32, %33 : vector<2x4x32xf32>
    %c0_23 = arith.constant 0 : index
    %c0_24 = arith.constant 0 : index
    %c0_25 = arith.constant 0 : index
    %35 = vector.load %arg5[%c0_23, %c0_24, %c0_25] : memref<2x4x32xf32, #tpu.memory_space<vmem>>, vector<2x4x32xf32>
    tpu.vector_store %arg5[%c0_23, %c0_24, %c0_25], %34 {strides = array<i32>} : memref<2x4x32xf32, #tpu.memory_space<vmem>>, vector<2x4x32xf32>,
    %cst_26 = arith.constant dense<0.000000e+00> : vector<2x4xf32>
    %36 = vector.multi_reduction <add>, %34, %cst_26 [2] : vector<2x4x32xf32> to vector<2x4xf32>
    %37 = vector.shape_cast %36 : vector<2x4xf32> to vector<2x4x1xf32>
    %cst_27 = arith.constant 3.125000e-02 : f32
    %38 = vector.broadcast %cst_27 : f32 to vector<2x4x1xf32>
    %39 = arith.mulf %37, %38 : vector<2x4x1xf32>
    %40 = vector.broadcast %39 : vector<2x4x1xf32> to vector<2x4x32xf32>
    %41 = arith.subf %34, %40 : vector<2x4x32xf32>
    %42 = arith.mulf %41, %41 : vector<2x4x32xf32>
    %cst_28 = arith.constant dense<0.000000e+00> : vector<2x4xf32>
    %43 = vector.multi_reduction <add>, %42, %cst_28 [2] : vector<2x4x32xf32> to vector<2x4xf32>
    %44 = vector.shape_cast %43 : vector<2x4xf32> to vector<2x4x1xf32>
    %cst_29 = arith.constant 3.125000e-02 : f32
    %45 = vector.broadcast %cst_29 : f32 to vector<2x4x1xf32>
    %46 = arith.mulf %44, %45 : vector<2x4x1xf32>
    %cst_30 = arith.constant 9.99999974E-6 : f32
    %47 = vector.broadcast %cst_30 : f32 to vector<2x4x1xf32>
    %48 = arith.addf %46, %47 : vector<2x4x1xf32>
    %49 = math.rsqrt %48 : vector<2x4x1xf32>
    %50 = vector.broadcast %49 : vector<2x4x1xf32> to vector<2x4x32xf32>
    %51 = arith.mulf %41, %50 : vector<2x4x32xf32>
    %52 = vector.shape_cast %0 : vector<1x32xf32> to vector<1x1x32xf32>
    %53 = vector.broadcast %52 : vector<1x1x32xf32> to vector<2x4x32xf32>
    %54 = arith.mulf %51, %53 : vector<2x4x32xf32>
    %55 = vector.shape_cast %1 : vector<1x32xf32> to vector<1x1x32xf32>
    %56 = vector.broadcast %55 : vector<1x1x32xf32> to vector<2x4x32xf32>
    %57 = arith.addf %54, %56 : vector<2x4x32xf32>
    %c0_31 = arith.constant 0 : index
    %c16 = arith.constant 16 : index
    %c0_32 = arith.constant 0 : index
    %58 = vector.load %arg4[%c0_31, %c16, %c0_32] : memref<2x21x32xf32, #tpu.memory_space<vmem>>, vector<2x4x32xf32>
    tpu.vector_store %arg4[%c0_31, %c16, %c0_32], %57 {strides = array<i32>} : memref<2x21x32xf32, #tpu.memory_space<vmem>>, vector<2x4x32xf32>,
    %c0_33 = arith.constant 0 : index
    %c0_34 = arith.constant 0 : index
    %c0_35 = arith.constant 0 : index
    %59 = tpu.strided_load %arg5[%c0_33, %c0_34, %c0_35] {strides = array<i32: 1, 4, 1>} : memref<2x4x32xf32, #tpu.memory_space<vmem>>, vector<2x1x32xf32>
    %c0_36 = arith.constant 0 : index
    %c1_37 = arith.constant 1 : index
    %c0_38 = arith.constant 0 : index
    %60 = tpu.strided_load %arg5[%c0_36, %c1_37, %c0_38] {strides = array<i32: 1, 4, 1>} : memref<2x4x32xf32, #tpu.memory_space<vmem>>, vector<2x1x32xf32>
    %61 = arith.addf %59, %60 : vector<2x1x32xf32>
    %c0_39 = arith.constant 0 : index
    %c2_40 = arith.constant 2 : index
    %c0_41 = arith.constant 0 : index
    %62 = tpu.strided_load %arg5[%c0_39, %c2_40, %c0_41] {strides = array<i32: 1, 4, 1>} : memref<2x4x32xf32, #tpu.memory_space<vmem>>, vector<2x1x32xf32>
    %63 = arith.addf %61, %62 : vector<2x1x32xf32>
    %c0_42 = arith.constant 0 : index
    %c3_43 = arith.constant 3 : index
    %c0_44 = arith.constant 0 : index
    %64 = tpu.strided_load %arg5[%c0_42, %c3_43, %c0_44] {strides = array<i32: 1, 4, 1>} : memref<2x4x32xf32, #tpu.memory_space<vmem>>, vector<2x1x32xf32>
    %65 = arith.addf %63, %64 : vector<2x1x32xf32>
    %cst_45 = arith.constant 2.500000e-01 : f32
    %66 = vector.broadcast %cst_45 : f32 to vector<2x1x32xf32>
    %67 = arith.mulf %65, %66 : vector<2x1x32xf32>
    %cst_46 = arith.constant dense<0.000000e+00> : vector<2x1xf32>
    %68 = vector.multi_reduction <add>, %67, %cst_46 [2] : vector<2x1x32xf32> to vector<2x1xf32>
    %69 = vector.shape_cast %68 : vector<2x1xf32> to vector<2x1x1xf32>
    %cst_47 = arith.constant 3.125000e-02 : f32
    %70 = vector.broadcast %cst_47 : f32 to vector<2x1x1xf32>
    %71 = arith.mulf %69, %70 : vector<2x1x1xf32>
    %72 = vector.broadcast %71 : vector<2x1x1xf32> to vector<2x1x32xf32>
    %73 = arith.subf %67, %72 : vector<2x1x32xf32>
    %74 = arith.mulf %73, %73 : vector<2x1x32xf32>
    %cst_48 = arith.constant dense<0.000000e+00> : vector<2x1xf32>
    %75 = vector.multi_reduction <add>, %74, %cst_48 [2] : vector<2x1x32xf32> to vector<2x1xf32>
    %76 = vector.shape_cast %75 : vector<2x1xf32> to vector<2x1x1xf32>
    %cst_49 = arith.constant 3.125000e-02 : f32
    %77 = vector.broadcast %cst_49 : f32 to vector<2x1x1xf32>
    %78 = arith.mulf %76, %77 : vector<2x1x1xf32>
    %cst_50 = arith.constant 9.99999974E-6 : f32
    %79 = vector.broadcast %cst_50 : f32 to vector<2x1x1xf32>
    %80 = arith.addf %78, %79 : vector<2x1x1xf32>
    %81 = math.rsqrt %80 : vector<2x1x1xf32>
    %82 = vector.broadcast %81 : vector<2x1x1xf32> to vector<2x1x32xf32>
    %83 = arith.mulf %73, %82 : vector<2x1x32xf32>
    %84 = vector.shape_cast %0 : vector<1x32xf32> to vector<1x1x32xf32>
    %85 = vector.broadcast %84 : vector<1x1x32xf32> to vector<2x1x32xf32>
    %86 = arith.mulf %83, %85 : vector<2x1x32xf32>
    %87 = vector.shape_cast %1 : vector<1x32xf32> to vector<1x1x32xf32>
    %88 = vector.broadcast %87 : vector<1x1x32xf32> to vector<2x1x32xf32>
    %89 = arith.addf %86, %88 : vector<2x1x32xf32>
    %c0_51 = arith.constant 0 : index
    %c20 = arith.constant 20 : index
    %c0_52 = arith.constant 0 : index
    %90 = vector.load %arg4[%c0_51, %c20, %c0_52] : memref<2x21x32xf32, #tpu.memory_space<vmem>>, vector<2x1x32xf32>
    tpu.vector_store %arg4[%c0_51, %c20, %c0_52], %89 {strides = array<i32>} : memref<2x21x32xf32, #tpu.memory_space<vmem>>, vector<2x1x32xf32>,
    return
  }
  func.func @transform_0(%arg0: i32) -> (i32, i32, i32) {
    %c0_i32 = arith.constant 0 : i32
    %c0_i32_0 = arith.constant 0 : i32
    %c0_i32_1 = arith.constant 0 : i32
    return %arg0, %c0_i32, %c0_i32_0 : i32, i32, i32
  }
  func.func @transform_1(%arg0: i32) -> (i32, i32) {
    %c0_i32 = arith.constant 0 : i32
    %c0_i32_0 = arith.constant 0 : i32
    %c0_i32_1 = arith.constant 0 : i32
    return %c0_i32, %c0_i32_0 : i32, i32
  }
  func.func @transform_2(%arg0: i32) -> (i32, i32) {
    %c0_i32 = arith.constant 0 : i32
    %c0_i32_0 = arith.constant 0 : i32
    %c0_i32_1 = arith.constant 0 : i32
    return %c0_i32, %c0_i32_0 : i32, i32
  }
  func.func @transform_3(%arg0: i32) -> (i32, i32, i32) {
    %c0_i32 = arith.constant 0 : i32
    %c0_i32_0 = arith.constant 0 : i32
    %c0_i32_1 = arith.constant 0 : i32
    return %arg0, %c0_i32, %c0_i32_0 : i32, i32, i32
  }
}

</mosaic_0001>

<llo_original>
// kernel: tpu_custom_call.1
$region0: #{tpu_custom_call.1}
  #allocation0 [shape = 'u32[]', space=smem, size = 0x4, offset = 0x4, fixed_abs, tag = 'smem constant byte address 0x4 - core index']
  #allocation1 [shape = 'u32[72,128]{1,0:T(1,128)}', space=vmem, size = 0x9000, scoped, tag = 'internal scratch']
  #allocation2 [shape = 'f32[2,4,32]{2,1,0:T(4,128)}', space=vmem, size = 0x1000, scoped, tag = 'scratch operand']
  %s0 = inlined_call_operand.hbm [shape: f32[2,16,32], index: 0, kind: input, shape index: {}]
  %s1 = inlined_call_operand.hbm [shape: f32[1,32], index: 1, kind: input, shape index: {}]
  %s2 = inlined_call_operand.vmem [shape: f32[1,32], index: 2, kind: input, shape index: {}]
  %s3 = inlined_call_operand.vmem [shape: f32[2,21,32], index: 3, kind: output, shape index: {}]
  %s4 = sld [smem:[#allocation0]]
  $region30: #{tpu_custom_call.1} parent=0
    _
  %s6 = ssub.s32 1, %s4
  %s7 = scalar_select 0, %s6, %s4
  $region1: #{tpu_custom_call.1} parent=0
    #allocation3 [shape = 'u8[16384]{0}', space=vmem, size = 0x4000, scoped, tag = 'input window, operand 0, single buffered']
    #allocation4 [shape = 's32[1]{0}', space=sflag, size = 0x4, scoped, tag = 'scoped memory for tpu_custom_call.1']
    #allocation5 [shape = 'u8[512]{0}', space=vmem, size = 0x400, scoped, tag = 'input window, operand 1, single buffered']
    #allocation6 [shape = 's32[1]{0}', space=sflag, size = 0x4, scoped, tag = 'scoped memory for tpu_custom_call.1']
    %8 = vsyncpa [#allocation4], 0
    %9 = vsyncpa [#allocation6], 0
    // Predicated region
    $region2: #{tpu_custom_call.1} parent=1 // pred_check
      _
    $region3: #{tpu_custom_call.1} parent=1 // pred_check_branch
      %11 = sbr.rel (0) target = $region5
    $region4: #{tpu_custom_call.1} parent=1 // pred_region
      %13 = vsyncadd [#allocation4], 0
      %s14 = sshll.u32 %s0, 4
      %s15 = int_to_ptr.hbm [resolvable:$true] %s14
      %s16 = sshll.u32 [#allocation3], 4
      %s17 = int_to_ptr.vmem [resolvable:$true] %s16
      %22 = dma.hbm_to_vmem [thread:$0]  %s15, 512, %s17, [#allocation4], 128, 128, 8
    $region5: #{tpu_custom_call.1} parent=1 // pred_fallthru
      _
    // Predicated region
    $region6: #{tpu_custom_call.1} parent=1 // pred_check
      _
    $region7: #{tpu_custom_call.1} parent=1 // pred_check_branch
      %24 = sbr.rel (0) target = $region9
    $region8: #{tpu_custom_call.1} parent=1 // pred_region
      %26 = vsyncadd [#allocation6], 0
      %s28 = sshll.u32 %s1, 4
      %s29 = int_to_ptr.hbm [resolvable:$true] %s28
      %s30 = sshll.u32 [#allocation5], 4
      %s31 = int_to_ptr.vmem [resolvable:$true] %s30
      %33 = dma.hbm_to_vmem [thread:$0]  %s29, 16, %s31, [#allocation6]
    $region9: #{tpu_custom_call.1} parent=1 // pred_fallthru
      _
    // Predicated region
    $region10: #{tpu_custom_call.1} parent=1 // pred_check
      _
    $region11: #{tpu_custom_call.1} parent=1 // pred_check_branch
      %35 = sbr.rel (0) target = $region13
    $region12: #{tpu_custom_call.1} parent=1 // pred_region
      _
    $region13: #{tpu_custom_call.1} parent=1 // pred_fallthru
      _
    // Predicated region
    $region14: #{tpu_custom_call.1} parent=1 // pred_check
      _
    $region15: #{tpu_custom_call.1} parent=1 // pred_check_branch
      %37 = sbr.rel (0) target = $region17
    $region16: #{tpu_custom_call.1} parent=1 // pred_region
      %39 = dma.done [#allocation4], 512
    $region17: #{tpu_custom_call.1} parent=1 // pred_fallthru
      _
    // Predicated region
    $region18: #{tpu_custom_call.1} parent=1 // pred_check
      _
    $region19: #{tpu_custom_call.1} parent=1 // pred_check_branch
      %41 = sbr.rel (0) target = $region21
    $region20: #{tpu_custom_call.1} parent=1 // pred_region
      %43 = dma.done [#allocation6], 16
    $region21: #{tpu_custom_call.1} parent=1 // pred_fallthru
      _
    %v44 = vld [vmem:[#allocation5] sm:$0x1]
    %v45 = vld [vmem:[%s2] sm:$0x1]
    %v46 = vld [vmem:[#allocation3] sm:$0xff]
    %v47 = vld [vmem:[#allocation3 + $0x8] sm:$0xff]
    %v48 = vld [vmem:[#allocation3 + $0x10] sm:$0xff]
    %v49 = vld [vmem:[#allocation3 + $0x18] sm:$0xff]
    %vm50 = vcmask 261120
    %v51 = vsel %vm50, %v46, 0.0
    %52 = vadd.xlane.f32.xlu0 %v51
    %v53 = vpop.xlane.xlu0 %52
    %v54 = vsel %vm50, %v47, 0.0
    %55 = vadd.xlane.f32.xlu0 %v54
    %v56 = vpop.xlane.xlu0 %55
    %v57 = vsel %vm50, %v48, 0.0
    %58 = vadd.xlane.f32.xlu0 %v57
    %v59 = vpop.xlane.xlu0 %58
    %v60 = vsel %vm50, %v49, 0.0
    %61 = vadd.xlane.f32.xlu0 %v60
    %v62 = vpop.xlane.xlu0 %61
    %v63 = vmul.f32 %v53, 0.03125
    %v64 = vmul.f32 %v56, 0.03125
    %v65 = vmul.f32 %v59, 0.03125
    %v66 = vmul.f32 %v62, 0.03125
    %v67 = vsub.f32 %v46, %v63
    %v68 = vsub.f32 %v47, %v64
    %v69 = vsub.f32 %v48, %v65
    %v70 = vsub.f32 %v49, %v66
    %v71 = vmul.f32 %v67, %v67
    %v72 = vmul.f32 %v68, %v68
    %v73 = vmul.f32 %v69, %v69
    %v74 = vmul.f32 %v70, %v70
    %v75 = vsel %vm50, %v71, 0.0
    %76 = vadd.xlane.f32.xlu0 %v75
    %v77 = vpop.xlane.xlu0 %76
    %v78 = vsel %vm50, %v72, 0.0
    %79 = vadd.xlane.f32.xlu0 %v78
    %v80 = vpop.xlane.xlu0 %79
    %v81 = vsel %vm50, %v73, 0.0
    %82 = vadd.xlane.f32.xlu0 %v81
    %v83 = vpop.xlane.xlu0 %82
    %v84 = vsel %vm50, %v74, 0.0
    %85 = vadd.xlane.f32.xlu0 %v84
    %v86 = vpop.xlane.xlu0 %85
    %v87 = vmul.f32 %v77, 0.03125
    %v88 = vmul.f32 %v80, 0.03125
    %v89 = vmul.f32 %v83, 0.03125
    %v90 = vmul.f32 %v86, 0.03125
    %v91 = vadd.f32 %v87, 1e-05
    %v92 = vadd.f32 %v88, 1e-05
    %v93 = vadd.f32 %v89, 1e-05
    %v94 = vadd.f32 %v90, 1e-05
    %v95 = vrsqrt.pop %v91
    %v96 = vmul.f32 %v95, %v91
    %v97 = vmul.f32 %v96, %v95
    %v98 = vmul.f32 0.5, %v97
    %v99 = vsub.f32 1.5, %v98
    %v100 = vmul.f32 %v95, %v99
    %vm101 = vweird.f32 %v91
    %vm102 = vweird.f32 %v95
    %vm103 = vmor %vm101, %vm102
    %v104 = vsel %vm103, %v95, %v100
    %v105 = vrsqrt.pop %v92
    %v106 = vmul.f32 %v105, %v92
    %v107 = vmul.f32 %v106, %v105
    %v108 = vmul.f32 0.5, %v107
    %v109 = vsub.f32 1.5, %v108
    %v110 = vmul.f32 %v105, %v109
    %vm111 = vweird.f32 %v92
    %vm112 = vweird.f32 %v105
    %vm113 = vmor %vm111, %vm112
    %v114 = vsel %vm113, %v105, %v110
    %v115 = vrsqrt.pop %v93
    %v116 = vmul.f32 %v115, %v93
    %v117 = vmul.f32 %v116, %v115
    %v118 = vmul.f32 0.5, %v117
    %v119 = vsub.f32 1.5, %v118
    %v120 = vmul.f32 %v115, %v119
    %vm121 = vweird.f32 %v93
    %vm122 = vweird.f32 %v115
    %vm123 = vmor %vm121, %vm122
    %v124 = vsel %vm123, %v115, %v120
    %v125 = vrsqrt.pop %v94
    %v126 = vmul.f32 %v125, %v94
    %v127 = vmul.f32 %v126, %v125
    %v128 = vmul.f32 0.5, %v127
    %v129 = vsub.f32 1.5, %v128
    %v130 = vmul.f32 %v125, %v129
    %vm131 = vweird.f32 %v94
    %vm132 = vweird.f32 %v125
    %vm133 = vmor %vm131, %vm132
    %v134 = vsel %vm133, %v125, %v130
    %v135 = vmul.f32 %v67, %v104
    %v136 = vmul.f32 %v68, %v114
    %v137 = vmul.f32 %v69, %v124
    %v138 = vmul.f32 %v70, %v134
    %v140 = vperm.slane %v44, 0
    %v142 = vmul.f32 %v135, %v140
    %v143 = vmul.f32 %v136, %v140
    %v144 = vmul.f32 %v137, %v140
    %v145 = vmul.f32 %v138, %v140
    %v147 = vperm.slane %v45, 0
    %v149 = vadd.f32 %v142, %v147
    %v150 = vadd.f32 %v143, %v147
    %v151 = vadd.f32 %v144, %v147
    %v152 = vadd.f32 %v145, %v147
    %153 = vst.msk [vmem:[%s3] sm:$0xff] %vm50, %v149
    %154 = vst.msk [vmem:[%s3 + $0x8] sm:$0xff] %vm50, %v150
    %155 = vst.msk [vmem:[%s3 + $0x18] sm:$0xff] %vm50, %v151
    %156 = vst.msk [vmem:[%s3 + $0x20] sm:$0xff] %vm50, %v152
    %v157 = vld [vmem:[#allocation3] ss:$4 sm:$0xf]
    %s158 = scalar_lea.vmem [#allocation3], 16
    %v159 = vld [vmem:[%s158] ss:$4 sm:$0xf]
    %s160 = scalar_lea.vmem [#allocation3], 1
    %v161 = vld [vmem:[%s160] ss:$4 sm:$0xf]
    %s162 = scalar_lea.vmem [#allocation3], 17
    %v163 = vld [vmem:[%s162] ss:$4 sm:$0xf]
    %v164 = vadd.f32 %v157, %v161
    %v165 = vadd.f32 %v159, %v163
    %s166 = scalar_lea.vmem [#allocation3], 2
    %v167 = vld [vmem:[%s166] ss:$4 sm:$0xf]
    %s168 = scalar_lea.vmem [#allocation3], 18
    %v169 = vld [vmem:[%s168] ss:$4 sm:$0xf]
    %v170 = vadd.f32 %v164, %v167
    %v171 = vadd.f32 %v165, %v169
    %s172 = scalar_lea.vmem [#allocation3], 3
    %v173 = vld [vmem:[%s172] ss:$4 sm:$0xf]
    %s174 = scalar_lea.vmem [#allocation3], 19
    %v175 = vld [vmem:[%s174] ss:$4 sm:$0xf]
    %v176 = vadd.f32 %v170, %v173
    %v177 = vadd.f32 %v171, %v175
    %v178 = vmul.f32 %v176, 0.25
    %v179 = vmul.f32 %v177, 0.25
    %vm180 = vcmask 257024
    %181 = vst.msk [vmem:[#allocation2] sm:$0xf] %vm180, %v178
    %182 = vst.msk [vmem:[#allocation2 + $0x4] sm:$0xf] %vm180, %v179
    %v183 = vsel %vm180, %v178, 0.0
    %184 = vadd.xlane.f32.xlu0 %v183
    %v185 = vpop.xlane.xlu0 %184
    %v186 = vsel %vm180, %v179, 0.0
    %187 = vadd.xlane.f32.xlu0 %v186
    %v188 = vpop.xlane.xlu0 %187
    %v189 = vmul.f32 %v185, 0.03125
    %v190 = vmul.f32 %v188, 0.03125
    %v191 = vsub.f32 %v178, %v189
    %v192 = vsub.f32 %v179, %v190
    %v193 = vmul.f32 %v191, %v191
    %v194 = vmul.f32 %v192, %v192
    %v195 = vsel %vm180, %v193, 0.0
    %196 = vadd.xlane.f32.xlu0 %v195
    %v197 = vpop.xlane.xlu0 %196
    %v198 = vsel %vm180, %v194, 0.0
    %199 = vadd.xlane.f32.xlu0 %v198
    %v200 = vpop.xlane.xlu0 %199
    %v201 = vmul.f32 %v197, 0.03125
    %v202 = vmul.f32 %v200, 0.03125
    %v203 = vadd.f32 %v201, 1e-05
    %v204 = vadd.f32 %v202, 1e-05
    %v205 = vrsqrt.pop %v203
    %v206 = vmul.f32 %v205, %v203
    %v207 = vmul.f32 %v206, %v205
    %v208 = vmul.f32 0.5, %v207
    %v209 = vsub.f32 1.5, %v208
    %v210 = vmul.f32 %v205, %v209
    %vm211 = vweird.f32 %v203
    %vm212 = vweird.f32 %v205
    %vm213 = vmor %vm211, %vm212
    %v214 = vsel %vm213, %v205, %v210
    %v215 = vrsqrt.pop %v204
    %v216 = vmul.f32 %v215, %v204
    %v217 = vmul.f32 %v216, %v215
    %v218 = vmul.f32 0.5, %v217
    %v219 = vsub.f32 1.5, %v218
    %v220 = vmul.f32 %v215, %v219
    %vm221 = vweird.f32 %v204
    %vm222 = vweird.f32 %v215
    %vm223 = vmor %vm221, %vm222
    %v224 = vsel %vm223, %v215, %v220
    %v225 = vmul.f32 %v191, %v214
    %v226 = vmul.f32 %v192, %v224
    %v227 = vmul.f32 %v225, %v140
    %v228 = vmul.f32 %v226, %v140
    %v229 = vadd.f32 %v227, %v147
    %v230 = vadd.f32 %v228, %v147
    %231 = vst.msk [vmem:[%s3 + $0x10] sm:$0xf] %vm180, %v229
    %232 = vst.msk [vmem:[%s3 + $0x28] sm:$0xf] %vm180, %v230
    %v233 = vld [vmem:[#allocation2] ss:$4 sm:$0x1]
    %s234 = scalar_lea.vmem [#allocation2], 4
    %v235 = vld [vmem:[%s234] ss:$4 sm:$0x1]
    %s236 = scalar_lea.vmem [#allocation2], 1
    %v237 = vld [vmem:[%s236] ss:$4 sm:$0x1]
    %s238 = scalar_lea.vmem [#allocation2], 5
    %v239 = vld [vmem:[%s238] ss:$4 sm:$0x1]
    %v240 = vadd.f32 %v233, %v237
    %v241 = vadd.f32 %v235, %v239
    %s242 = scalar_lea.vmem [#allocation2], 2
    %v243 = vld [vmem:[%s242] ss:$4 sm:$0x1]
    %s244 = scalar_lea.vmem [#allocation2], 6
    %v245 = vld [vmem:[%s244] ss:$4 sm:$0x1]
    %v246 = vadd.f32 %v240, %v243
    %v247 = vadd.f32 %v241, %v245
    %s248 = scalar_lea.vmem [#allocation2], 3
    %v249 = vld [vmem:[%s248] ss:$4 sm:$0x1]
    %s250 = scalar_lea.vmem [#allocation2], 7
    %v251 = vld [vmem:[%s250] ss:$4 sm:$0x1]
    %v252 = vadd.f32 %v246, %v249
    %v253 = vadd.f32 %v247, %v251
    %v254 = vmul.f32 %v252, 0.25
    %v255 = vmul.f32 %v253, 0.25
    %vm256 = vcmask 253952
    %v257 = vsel %vm256, %v254, 0.0
    %258 = vadd.xlane.f32.xlu0 %v257
    %v259 = vpop.xlane.xlu0 %258
    %v260 = vsel %vm256, %v255, 0.0
    %261 = vadd.xlane.f32.xlu0 %v260
    %v262 = vpop.xlane.xlu0 %261
    %v263 = vmul.f32 %v259, 0.03125
    %v264 = vmul.f32 %v262, 0.03125
    %v265 = vsub.f32 %v254, %v263
    %v266 = vsub.f32 %v255, %v264
    %v267 = vmul.f32 %v265, %v265
    %v268 = vmul.f32 %v266, %v266
    %v269 = vsel %vm256, %v267, 0.0
    %270 = vadd.xlane.f32.xlu0 %v269
    %v271 = vpop.xlane.xlu0 %270
    %v272 = vsel %vm256, %v268, 0.0
    %273 = vadd.xlane.f32.xlu0 %v272
    %v274 = vpop.xlane.xlu0 %273
    %v275 = vmul.f32 %v271, 0.03125
    %v276 = vmul.f32 %v274, 0.03125
    %v277 = vadd.f32 %v275, 1e-05
    %v278 = vadd.f32 %v276, 1e-05
    %v279 = vrsqrt.pop %v277
    %v280 = vmul.f32 %v279, %v277
    %v281 = vmul.f32 %v280, %v279
    %v282 = vmul.f32 0.5, %v281
    %v283 = vsub.f32 1.5, %v282
    %v284 = vmul.f32 %v279, %v283
    %vm285 = vweird.f32 %v277
    %vm286 = vweird.f32 %v279
    %vm287 = vmor %vm285, %vm286
    %v288 = vsel %vm287, %v279, %v284
    %v289 = vrsqrt.pop %v278
    %v290 = vmul.f32 %v289, %v278
    %v291 = vmul.f32 %v290, %v289
    %v292 = vmul.f32 0.5, %v291
    %v293 = vsub.f32 1.5, %v292
    %v294 = vmul.f32 %v289, %v293
    %vm295 = vweird.f32 %v278
    %vm296 = vweird.f32 %v289
    %vm297 = vmor %vm295, %vm296
    %v298 = vsel %vm297, %v289, %v294
    %v299 = vmul.f32 %v265, %v288
    %v300 = vmul.f32 %v266, %v298
    %v301 = vmul.f32 %v299, %v44
    %v302 = vmul.f32 %v300, %v44
    %v303 = vadd.f32 %v301, %v45
    %v304 = vadd.f32 %v302, %v45
    %305 = vst.msk [vmem:[%s3 + $0x14] sm:$0x1] %vm256, %v303
    %306 = vst.msk [vmem:[%s3 + $0x2c] sm:$0x1] %vm256, %v304
    // Predicated region
    $region22: #{tpu_custom_call.1} parent=1 // pred_check
      _
    $region23: #{tpu_custom_call.1} parent=1 // pred_check_branch
      %308 = sbr.rel (0) target = $region25
    $region24: #{tpu_custom_call.1} parent=1 // pred_region
      _
    $region25: #{tpu_custom_call.1} parent=1 // pred_fallthru
      _
    // Predicated region
    $region26: #{tpu_custom_call.1} parent=1 // pred_check
      _
    $region27: #{tpu_custom_call.1} parent=1 // pred_check_branch
      %310 = sbr.rel (0) target = $region29
    $region28: #{tpu_custom_call.1} parent=1 // pred_region
      _
    $region29: #{tpu_custom_call.1} parent=1 // pred_fallthru
      _
    %311 = vsyncpa [#allocation4], 1
    %312 = vsyncpa [#allocation6], 1

</llo_original>
